<compile_context>
chip_gen: v6e
topology: v6e:2x2x1
jax: 0.10.0
libtpu: 0.0.40
codegen_flags: <defaults>
</compile_context>

<pallas_src>
import functools

import jax
import jax.numpy as jnp
from jax.experimental import pallas as pl
from jax.experimental.pallas import tpu as pltpu

EMB_DIM = 128          # emb_dim
NUM_LAYERS = 5         # num_layers
POS_DIM = 2            # pos_dim
NUM_HIDDEN = NUM_LAYERS - 2
NEG_SLOPE = 0.01       # nn.LeakyReLU default negative_slope

# Scoped-VMEM limit: our per-step footprint (double-buffered (3,M)/(2,M) f32
# slabs + ~0.4 MiB resident weights + (128,M) bf16/f32 activations) is < 6 MiB
# even at M = 2048, so 32 MiB is generous yet fits v7x's 64 MiB physical VMEM
# and raises v5e's 16 MiB scoped default.
VMEM_LIMIT_BYTES = 32 * 1024 * 1024


def _leaky_relu(x):
    # max(x, 0.01*x) == LeakyReLU(x) for slope < 1 (one VALU max vs cmp+select)
    return jnp.maximum(x, NEG_SLOPE * x)


def mlp_denoiser_kernel(x_ref, w0_ref, b0_ref, wh_ref, bh_ref,
                        wo_ref, bo_ref, out_ref, *, num_hidden):
    x = x_ref[...]            # (3, M) f32, rows = [pos_x, pos_y, t]
    w0 = w0_ref[...]          # (EMB, 3) f32

    # dummy_emb: Linear(POS_DIM + 1, EMB).  K=3 is too small to be worth an MXU
    # pass, so do it as broadcast FMAs on the VPU (keeps the MXU free).
    h = (w0[:, 0:1] * x[0:1, :]
         + w0[:, 1:2] * x[1:2, :]
         + w0[:, 2:3] * x[2:3, :]
         + b0_ref[...])                                   # (EMB, M) f32
    h = h.astype(jnp.bfloat16)                            # bf16 between layers

    # (Linear(EMB, EMB) -> LeakyReLU) x num_hidden on the MXU: bf16 in, f32 acc.
    for i in range(num_hidden):
        z = jnp.dot(wh_ref[i], h,
                    preferred_element_type=jnp.float32) + bh_ref[i]   # f32
        h = _leaky_relu(z).astype(jnp.bfloat16)           # (EMB, M) bf16

    # final Linear(EMB, 2): bf16 x bf16 -> f32 accumulation
    out = jnp.dot(wo_ref[...], h,
                  preferred_element_type=jnp.float32) + bo_ref[...]   # (2, M) f32

    # pred = out - cur_pos.  The per-batch mean subtraction over atoms is done
    # in the wrapper on the tiny (B, N, 2) output (perf review: removes the
    # O(M^2) centering matmul/constant from the kernel).
    out_ref[...] = out - x[0:POS_DIM, :]


def _choose_tb(B, N, max_rows=2048, min_rows_multi=512):
    """Batches folded per grid step.

    Valid TB: divisor of B, TB*N <= max_rows, and when there is more than one
    grid block the lane extent TB*N must be a multiple of 128 (a single
    full-extent block is always legal).  Among valid choices prefer >= 2 grid
    steps with a well-filled tile (>= min_rows_multi columns) so v7x's two
    TensorCores both get work; otherwise take the largest tile.
    """
    valid = []
    for tb in range(1, B + 1):
        if B % tb:
            continue
        rows = tb * N
        nb = B // tb
        if rows > max_rows:
            continue
        if nb > 1 and rows % 128 != 0:
            continue
        valid.append((tb, rows, nb))
    if not valid:
        # Fallback: one full-extent block (lane-sparse but correct).
        return B
    multi = [v for v in valid if v[2] >= 2 and v[1] >= min_rows_multi]
    pool = multi if multi else valid
    return max(pool, key=lambda v: v[1])[0]


def mlp_denoiser(cur_pos, t, params):
    """Pallas forward.  cur_pos: (B, N, 2) f32, t: (B,) f32 -> (B, N, 2) f32."""
    W0, b0, Wh, bh, Wo, bo = params          # torch nn.Linear layout: (out, in)
    B, N, pd = cur_pos.shape
    assert pd == POS_DIM
    num_hidden = Wh.shape[0]

    TB = _choose_tb(B, N)
    M = TB * N                               # columns per grid step
    num_blocks = B // TB

    # ---- wrapper-side layout plumbing (lane-dense slabs, no compute hoisting) ----
    pos_flat = cur_pos.reshape(B * N, POS_DIM).astype(jnp.float32)
    t_row = jnp.repeat(t.astype(jnp.float32), N)[:, None]            # (B*N, 1)
    x_in = jnp.concatenate([pos_flat, t_row], axis=1).T              # (3, B*N)

    # Weights stay in torch (out, in) orientation; matmul weights go to bf16.
    w0 = W0.astype(jnp.float32)                                      # (EMB, 3)
    b0c = b0.astype(jnp.float32)[:, None]                            # (EMB, 1)
    wh = Wh.astype(jnp.bfloat16)                                     # (H, EMB, EMB)
    bhc = bh.astype(jnp.float32)[:, :, None]                         # (H, EMB, 1)
    wo = Wo.astype(jnp.bfloat16)                                     # (2, EMB)
    boc = bo.astype(jnp.float32)[:, None]                            # (2, 1)

    kernel = functools.partial(mlp_denoiser_kernel, num_hidden=num_hidden)

    # Advisory cost estimate (lets XLA schedule neighbours around the call).
    flops = 2 * B * N * ((POS_DIM + 1) * EMB_DIM
                         + num_hidden * EMB_DIM * EMB_DIM
                         + EMB_DIM * POS_DIM)
    bytes_accessed = (x_in.size * 4 + B * N * POS_DIM * 4
                      + w0.size * 4 + b0c.size * 4 + wh.size * 2
                      + bhc.size * 4 + wo.size * 2 + boc.size * 4)
    cost = pl.CostEstimate(flops=flops, transcendentals=0,
                           bytes_accessed=bytes_accessed)

    out_t = pl.pallas_call(
        kernel,
        out_shape=jax.ShapeDtypeStruct((POS_DIM, B * N), jnp.float32),
        grid_spec=pltpu.PrefetchScalarGridSpec(
            num_scalar_prefetch=0,
            grid=(num_blocks,),
            in_specs=[
                pl.BlockSpec((POS_DIM + 1, M), lambda i: (0, i)),         # x slab
                pl.BlockSpec((EMB_DIM, POS_DIM + 1), lambda i: (0, 0)),   # W0
                pl.BlockSpec((EMB_DIM, 1), lambda i: (0, 0)),             # b0
                pl.BlockSpec((num_hidden, EMB_DIM, EMB_DIM),
                             lambda i: (0, 0, 0)),                        # hidden W (bf16)
                pl.BlockSpec((num_hidden, EMB_DIM, 1),
                             lambda i: (0, 0, 0)),                        # hidden b
                pl.BlockSpec((POS_DIM, EMB_DIM), lambda i: (0, 0)),       # Wout (bf16)
                pl.BlockSpec((POS_DIM, 1), lambda i: (0, 0)),             # bout
            ],
            out_specs=pl.BlockSpec((POS_DIM, M), lambda i: (0, i)),       # lane-dense
        ),
        compiler_params=pltpu.CompilerParams(
            dimension_semantics=("parallel",),
            vmem_limit_bytes=VMEM_LIMIT_BYTES),
        cost_estimate=cost,
    )(x_in, w0, b0c, wh, bhc, wo, boc)

    # back to (B, N, 2); then remove the per-batch mean over atoms (linear op
    # on the tiny output -> cheaper and exact in f32 here vs. in-kernel matmul).
    pred = out_t.T.reshape(B, N, POS_DIM)
    return pred - jnp.mean(pred, axis=-2, keepdims=True)


def reference_forward(cur_pos, t, params):
    """Plain-JAX (f32) mirror of the PyTorch forward for verification."""
    W0, b0, Wh, bh, Wo, bo = params
    B, N, _ = cur_pos.shape
    tt = jnp.broadcast_to(t.reshape(B, 1, 1), (B, N, 1))      # inflate + expand
    x = jnp.concatenate([cur_pos, tt], axis=-1)               # (B, N, 3)
    h = x @ W0.T + b0
    for i in range(Wh.shape[0]):
        h = h @ Wh[i].T + bh[i]
        h = jnp.where(h > 0, h, NEG_SLOPE * h)
    out = h @ Wo.T + bo                                       # (B, N, 2)
    pred = out - cur_pos
    return pred - jnp.mean(pred, axis=-2, keepdims=True)


def init_params(key):
    """Deterministic synthetic params matching nn.Linear shapes (out, in)."""
    ks = jax.random.split(key, 6)
    W0 = 0.2 * jax.random.normal(ks[0], (EMB_DIM, POS_DIM + 1), jnp.float32)
    b0 = 0.05 * jax.random.normal(ks[1], (EMB_DIM,), jnp.float32)
    Wh = 0.08 * jax.random.normal(ks[2], (NUM_HIDDEN, EMB_DIM, EMB_DIM), jnp.float32)
    bh = 0.05 * jax.random.normal(ks[3], (NUM_HIDDEN, EMB_DIM), jnp.float32)
    Wo = 0.1 * jax.random.normal(ks[4], (POS_DIM, EMB_DIM), jnp.float32)
    bo = 0.05 * jax.random.normal(ks[5], (POS_DIM,), jnp.float32)
    return (W0, b0, Wh, bh, Wo, bo)


if __name__ == "__main__":
    key = jax.random.PRNGKey(0)
    k_pos, k_t, k_par = jax.random.split(key, 3)

    B, N = 2, 8
    cur_pos = jax.random.normal(k_pos, (B, N, POS_DIM), jnp.float32)
    t = jax.random.uniform(k_t, (B,), jnp.float32)            # normalized times
    params = init_params(k_par)

    fwd = jax.jit(mlp_denoiser)
    out = jax.block_until_ready(fwd(cur_pos, t, params))

    ref = reference_forward(cur_pos, t, params)
    assert out.shape == (B, N, POS_DIM)
    # bf16 hidden matmuls / activations (f32 accumulation) -> loosened tolerance.
    assert jnp.allclose(out, ref, atol=3e-2, rtol=3e-2), "Pallas vs reference mismatch"

    print("KERNEL_OK")
</pallas_src>

<mosaic_0001>
module attributes {stable_mosaic.version = 11 : i64} {
  func.func @mlp_denoiser_kernel(%arg0: i32, %arg1: memref<3x16xf32, #tpu.memory_space<vmem>>, %arg2: memref<128x3xf32, #tpu.memory_space<vmem>>, %arg3: memref<128x1xf32, #tpu.memory_space<vmem>>, %arg4: memref<3x128x128xbf16, #tpu.memory_space<vmem>>, %arg5: memref<3x128x1xf32, #tpu.memory_space<vmem>>, %arg6: memref<2x128xbf16, #tpu.memory_space<vmem>>, %arg7: memref<2x1xf32, #tpu.memory_space<vmem>>, %arg8: memref<2x16xf32, #tpu.memory_space<vmem>>) attributes {dimension_semantics = [#tpu.dimension_semantics<parallel>], iteration_bounds = array<i64: 1>, scalar_prefetch = 0 : i64, scratch_operands = 0 : i64, tpu.core_type = #tpu.core_type<tc>, window_params = [{transform_indices = @transform_0, window_bounds = array<i64: 3, 16>}, {pipeline_mode = #tpu.pipeline_mode<synchronous>, transform_indices = @transform_1, window_bounds = array<i64: 128, 3>}, {pipeline_mode = #tpu.pipeline_mode<synchronous>, transform_indices = @transform_2, window_bounds = array<i64: 128, 1>}, {pipeline_mode = #tpu.pipeline_mode<synchronous>, transform_indices = @transform_3, window_bounds = array<i64: 3, 128, 128>}, {pipeline_mode = #tpu.pipeline_mode<synchronous>, transform_indices = @transform_4, window_bounds = array<i64: 3, 128, 1>}, {pipeline_mode = #tpu.pipeline_mode<synchronous>, transform_indices = @transform_5, window_bounds = array<i64: 2, 128>}, {pipeline_mode = #tpu.pipeline_mode<synchronous>, transform_indices = @transform_6, window_bounds = array<i64: 2, 1>}, {transform_indices = @transform_7, window_bounds = array<i64: 2, 16>}]} {
    %c0 = arith.constant 0 : index
    %c0_0 = arith.constant 0 : index
    %0 = vector.load %arg1[%c0, %c0_0] : memref<3x16xf32, #tpu.memory_space<vmem>>, vector<3x16xf32>
    %c0_1 = arith.constant 0 : index
    %c0_2 = arith.constant 0 : index
    %1 = vector.load %arg2[%c0_1, %c0_2] : memref<128x3xf32, #tpu.memory_space<vmem>>, vector<128x3xf32>
    %2 = vector.extract_strided_slice %1 {offsets = [0, 0], sizes = [128, 1], strides = [1, 1]} : vector<128x3xf32> to vector<128x1xf32>
    %3 = vector.extract_strided_slice %0 {offsets = [0, 0], sizes = [1, 16], strides = [1, 1]} : vector<3x16xf32> to vector<1x16xf32>
    %4 = vector.broadcast %2 : vector<128x1xf32> to vector<128x16xf32>
    %5 = vector.broadcast %3 : vector<1x16xf32> to vector<128x16xf32>
    %6 = arith.mulf %4, %5 : vector<128x16xf32>
    %7 = vector.extract_strided_slice %1 {offsets = [0, 1], sizes = [128, 1], strides = [1, 1]} : vector<128x3xf32> to vector<128x1xf32>
    %8 = vector.extract_strided_slice %0 {offsets = [1, 0], sizes = [1, 16], strides = [1, 1]} : vector<3x16xf32> to vector<1x16xf32>
    %9 = vector.broadcast %7 : vector<128x1xf32> to vector<128x16xf32>
    %10 = vector.broadcast %8 : vector<1x16xf32> to vector<128x16xf32>
    %11 = arith.mulf %9, %10 : vector<128x16xf32>
    %12 = arith.addf %6, %11 : vector<128x16xf32>
    %13 = vector.extract_strided_slice %1 {offsets = [0, 2], sizes = [128, 1], strides = [1, 1]} : vector<128x3xf32> to vector<128x1xf32>
    %14 = vector.extract_strided_slice %0 {offsets = [2, 0], sizes = [1, 16], strides = [1, 1]} : vector<3x16xf32> to vector<1x16xf32>
    %15 = vector.broadcast %13 : vector<128x1xf32> to vector<128x16xf32>
    %16 = vector.broadcast %14 : vector<1x16xf32> to vector<128x16xf32>
    %17 = arith.mulf %15, %16 : vector<128x16xf32>
    %18 = arith.addf %12, %17 : vector<128x16xf32>
    %c0_3 = arith.constant 0 : index
    %c0_4 = arith.constant 0 : index
    %19 = vector.load %arg3[%c0_3, %c0_4] : memref<128x1xf32, #tpu.memory_space<vmem>>, vector<128x1xf32>
    %20 = vector.broadcast %19 : vector<128x1xf32> to vector<128x16xf32>
    %21 = arith.addf %18, %20 : vector<128x16xf32>
    %22 = arith.truncf %21 : vector<128x16xf32> to vector<128x16xbf16>
    %c0_5 = arith.constant 0 : index
    %c0_6 = arith.constant 0 : index
    %c0_7 = arith.constant 0 : index
    %23 = vector.load %arg4[%c0_5, %c0_6, %c0_7] : memref<3x128x128xbf16, #tpu.memory_space<vmem>>, vector<1x128x128xbf16>
    %24 = vector.shape_cast %23 : vector<1x128x128xbf16> to vector<128x128xbf16>
    %cst = arith.constant dense<0.000000e+00> : vector<128x16xf32>
    %25 = tpu.matmul %24, %22, %cst {dimension_numbers = #tpu.dot_dimension_numbers<[1], [0], [0], [1], [0, 0, 1, 1], [], []>} : vector<128x128xbf16>, vector<128x16xbf16>, vector<128x16xf32> -> vector<128x16xf32>
    %c0_8 = arith.constant 0 : index
    %c0_9 = arith.constant 0 : index
    %c0_10 = arith.constant 0 : index
    %26 = vector.load %arg5[%c0_8, %c0_9, %c0_10] : memref<3x128x1xf32, #tpu.memory_space<vmem>>, vector<1x128x1xf32>
    %27 = vector.shape_cast %26 : vector<1x128x1xf32> to vector<128x1xf32>
    %28 = vector.broadcast %27 : vector<128x1xf32> to vector<128x16xf32>
    %29 = arith.addf %25, %28 : vector<128x16xf32>
    %cst_11 = arith.constant 0.00999999977 : f32
    %30 = vector.broadcast %cst_11 : f32 to vector<128x16xf32>
    %31 = arith.mulf %30, %29 : vector<128x16xf32>
    %32 = arith.maximumf %29, %31 : vector<128x16xf32>
    %33 = arith.truncf %32 : vector<128x16xf32> to vector<128x16xbf16>
    %c1 = arith.constant 1 : index
    %c0_12 = arith.constant 0 : index
    %c0_13 = arith.constant 0 : index
    %34 = vector.load %arg4[%c1, %c0_12, %c0_13] : memref<3x128x128xbf16, #tpu.memory_space<vmem>>, vector<1x128x128xbf16>
    %35 = vector.shape_cast %34 : vector<1x128x128xbf16> to vector<128x128xbf16>
    %cst_14 = arith.constant dense<0.000000e+00> : vector<128x16xf32>
    %36 = tpu.matmul %35, %33, %cst_14 {dimension_numbers = #tpu.dot_dimension_numbers<[1], [0], [0], [1], [0, 0, 1, 1], [], []>} : vector<128x128xbf16>, vector<128x16xbf16>, vector<128x16xf32> -> vector<128x16xf32>
    %c1_15 = arith.constant 1 : index
    %c0_16 = arith.constant 0 : index
    %c0_17 = arith.constant 0 : index
    %37 = vector.load %arg5[%c1_15, %c0_16, %c0_17] : memref<3x128x1xf32, #tpu.memory_space<vmem>>, vector<1x128x1xf32>
    %38 = vector.shape_cast %37 : vector<1x128x1xf32> to vector<128x1xf32>
    %39 = vector.broadcast %38 : vector<128x1xf32> to vector<128x16xf32>
    %40 = arith.addf %36, %39 : vector<128x16xf32>
    %cst_18 = arith.constant 0.00999999977 : f32
    %41 = vector.broadcast %cst_18 : f32 to vector<128x16xf32>
    %42 = arith.mulf %41, %40 : vector<128x16xf32>
    %43 = arith.maximumf %40, %42 : vector<128x16xf32>
    %44 = arith.truncf %43 : vector<128x16xf32> to vector<128x16xbf16>
    %c2 = arith.constant 2 : index
    %c0_19 = arith.constant 0 : index
    %c0_20 = arith.constant 0 : index
    %45 = vector.load %arg4[%c2, %c0_19, %c0_20] : memref<3x128x128xbf16, #tpu.memory_space<vmem>>, vector<1x128x128xbf16>
    %46 = vector.shape_cast %45 : vector<1x128x128xbf16> to vector<128x128xbf16>
    %cst_21 = arith.constant dense<0.000000e+00> : vector<128x16xf32>
    %47 = tpu.matmul %46, %44, %cst_21 {dimension_numbers = #tpu.dot_dimension_numbers<[1], [0], [0], [1], [0, 0, 1, 1], [], []>} : vector<128x128xbf16>, vector<128x16xbf16>, vector<128x16xf32> -> vector<128x16xf32>
    %c2_22 = arith.constant 2 : index
    %c0_23 = arith.constant 0 : index
    %c0_24 = arith.constant 0 : index
    %48 = vector.load %arg5[%c2_22, %c0_23, %c0_24] : memref<3x128x1xf32, #tpu.memory_space<vmem>>, vector<1x128x1xf32>
    %49 = vector.shape_cast %48 : vector<1x128x1xf32> to vector<128x1xf32>
    %50 = vector.broadcast %49 : vector<128x1xf32> to vector<128x16xf32>
    %51 = arith.addf %47, %50 : vector<128x16xf32>
    %cst_25 = arith.constant 0.00999999977 : f32
    %52 = vector.broadcast %cst_25 : f32 to vector<128x16xf32>
    %53 = arith.mulf %52, %51 : vector<128x16xf32>
    %54 = arith.maximumf %51, %53 : vector<128x16xf32>
    %55 = arith.truncf %54 : vector<128x16xf32> to vector<128x16xbf16>
    %c0_26 = arith.constant 0 : index
    %c0_27 = arith.constant 0 : index
    %56 = vector.load %arg6[%c0_26, %c0_27] : memref<2x128xbf16, #tpu.memory_space<vmem>>, vector<2x128xbf16>
    %cst_28 = arith.constant dense<0.000000e+00> : vector<2x16xf32>
    %57 = tpu.matmul %56, %55, %cst_28 {dimension_numbers = #tpu.dot_dimension_numbers<[1], [0], [0], [1], [0, 0, 1, 1], [], []>} : vector<2x128xbf16>, vector<128x16xbf16>, vector<2x16xf32> -> vector<2x16xf32>
    %c0_29 = arith.constant 0 : index
    %c0_30 = arith.constant 0 : index
    %58 = vector.load %arg7[%c0_29, %c0_30] : memref<2x1xf32, #tpu.memory_space<vmem>>, vector<2x1xf32>
    %59 = vector.broadcast %58 : vector<2x1xf32> to vector<2x16xf32>
    %60 = arith.addf %57, %59 : vector<2x16xf32>
    %61 = vector.extract_strided_slice %0 {offsets = [0, 0], sizes = [2, 16], strides = [1, 1]} : vector<3x16xf32> to vector<2x16xf32>
    %62 = arith.subf %60, %61 : vector<2x16xf32>
    %c0_31 = arith.constant 0 : index
    %c0_32 = arith.constant 0 : index
    %63 = vector.load %arg8[%c0_31, %c0_32] : memref<2x16xf32, #tpu.memory_space<vmem>>, vector<2x16xf32>
    tpu.vector_store %arg8[%c0_31, %c0_32], %62 {strides = array<i32>} : memref<2x16xf32, #tpu.memory_space<vmem>>, vector<2x16xf32>,
    return
  }
  func.func @transform_0(%arg0: i32) -> (i32, i32) {
    %c0_i32 = arith.constant 0 : i32
    %c0_i32_0 = arith.constant 0 : i32
    return %c0_i32, %arg0 : i32, i32
  }
  func.func @transform_1(%arg0: i32) -> (i32, i32) {
    %c0_i32 = arith.constant 0 : i32
    %c0_i32_0 = arith.constant 0 : i32
    %c0_i32_1 = arith.constant 0 : i32
    return %c0_i32, %c0_i32_0 : i32, i32
  }
  func.func @transform_2(%arg0: i32) -> (i32, i32) {
    %c0_i32 = arith.constant 0 : i32
    %c0_i32_0 = arith.constant 0 : i32
    %c0_i32_1 = arith.constant 0 : i32
    return %c0_i32, %c0_i32_0 : i32, i32
  }
  func.func @transform_3(%arg0: i32) -> (i32, i32, i32) {
    %c0_i32 = arith.constant 0 : i32
    %c0_i32_0 = arith.constant 0 : i32
    %c0_i32_1 = arith.constant 0 : i32
    %c0_i32_2 = arith.constant 0 : i32
    return %c0_i32, %c0_i32_0, %c0_i32_1 : i32, i32, i32
  }
  func.func @transform_4(%arg0: i32) -> (i32, i32, i32) {
    %c0_i32 = arith.constant 0 : i32
    %c0_i32_0 = arith.constant 0 : i32
    %c0_i32_1 = arith.constant 0 : i32
    %c0_i32_2 = arith.constant 0 : i32
    return %c0_i32, %c0_i32_0, %c0_i32_1 : i32, i32, i32
  }
  func.func @transform_5(%arg0: i32) -> (i32, i32) {
    %c0_i32 = arith.constant 0 : i32
    %c0_i32_0 = arith.constant 0 : i32
    %c0_i32_1 = arith.constant 0 : i32
    return %c0_i32, %c0_i32_0 : i32, i32
  }
  func.func @transform_6(%arg0: i32) -> (i32, i32) {
    %c0_i32 = arith.constant 0 : i32
    %c0_i32_0 = arith.constant 0 : i32
    %c0_i32_1 = arith.constant 0 : i32
    return %c0_i32, %c0_i32_0 : i32, i32
  }
  func.func @transform_7(%arg0: i32) -> (i32, i32) {
    %c0_i32 = arith.constant 0 : i32
    %c0_i32_0 = arith.constant 0 : i32
    return %c0_i32, %arg0 : i32, i32
  }
}

</mosaic_0001>

<llo_original>
// kernel: mlp_denoiser.1
$region0: #{mlp_denoiser.1}
  #allocation0 [shape = 'u32[]', space=smem, size = 0x4, offset = 0x4, fixed_abs, tag = 'smem constant byte address 0x4 - core index']
  #allocation1 [shape = 'u32[144,128]{1,0:T(1,128)}', space=vmem, size = 0x12000, scoped, tag = 'internal scratch']
  %s0 = inlined_call_operand.vmem [shape: f32[3,16], index: 0, kind: input, shape index: {}]
  %s1 = inlined_call_operand.vmem [shape: f32[128,3], index: 1, kind: input, shape index: {}]
  %s2 = inlined_call_operand.vmem [shape: f32[128,1], index: 2, kind: input, shape index: {}]
  %s3 = inlined_call_operand.vmem [shape: bf16[3,128,128], index: 3, kind: input, shape index: {}]
  %s4 = inlined_call_operand.vmem [shape: f32[3,128,1], index: 4, kind: input, shape index: {}]
  %s5 = inlined_call_operand.vmem [shape: bf16[2,128], index: 5, kind: input, shape index: {}]
  %s6 = inlined_call_operand.vmem [shape: f32[2,1], index: 6, kind: input, shape index: {}]
  %s7 = inlined_call_operand.vmem [shape: f32[2,16], index: 7, kind: output, shape index: {}]
  %s8 = sld [smem:[#allocation0]]
  $region38: #{mlp_denoiser.1} parent=0
    _
  %s10 = ssub.s32 1, %s8
  %s11 = scalar_select 0, %s10, %s8
  // Predicated region
  $region2: #{mlp_denoiser.1} parent=0 // pred_check
    _
  $region3: #{mlp_denoiser.1} parent=0 // pred_check_branch
    %13 = sbr.rel (0) target = $region5
  $region4: #{mlp_denoiser.1} parent=0 // pred_region
    _
  $region5: #{mlp_denoiser.1} parent=0 // pred_fallthru
    _
  // Predicated region
  $region6: #{mlp_denoiser.1} parent=0 // pred_check
    _
  $region7: #{mlp_denoiser.1} parent=0 // pred_check_branch
    %15 = sbr.rel (0) target = $region9
  $region8: #{mlp_denoiser.1} parent=0 // pred_region
    _
  $region9: #{mlp_denoiser.1} parent=0 // pred_fallthru
    _
  // Predicated region
  $region10: #{mlp_denoiser.1} parent=0 // pred_check
    _
  $region11: #{mlp_denoiser.1} parent=0 // pred_check_branch
    %17 = sbr.rel (0) target = $region13
  $region12: #{mlp_denoiser.1} parent=0 // pred_region
    _
  $region13: #{mlp_denoiser.1} parent=0 // pred_fallthru
    _
  // Predicated region
  $region14: #{mlp_denoiser.1} parent=0 // pred_check
    _
  $region15: #{mlp_denoiser.1} parent=0 // pred_check_branch
    %19 = sbr.rel (0) target = $region17
  $region16: #{mlp_denoiser.1} parent=0 // pred_region
    _
  $region17: #{mlp_denoiser.1} parent=0 // pred_fallthru
    _
  // Predicated region
  $region18: #{mlp_denoiser.1} parent=0 // pred_check
    _
  $region19: #{mlp_denoiser.1} parent=0 // pred_check_branch
    %21 = sbr.rel (0) target = $region21
  $region20: #{mlp_denoiser.1} parent=0 // pred_region
    _
  $region21: #{mlp_denoiser.1} parent=0 // pred_fallthru
    _
  // Predicated region
  $region22: #{mlp_denoiser.1} parent=0 // pred_check
    _
  $region23: #{mlp_denoiser.1} parent=0 // pred_check_branch
    %23 = sbr.rel (0) target = $region25
  $region24: #{mlp_denoiser.1} parent=0 // pred_region
    _
  $region25: #{mlp_denoiser.1} parent=0 // pred_fallthru
    _
  // Predicated region
  $region26: #{mlp_denoiser.1} parent=0 // pred_check
    _
  $region27: #{mlp_denoiser.1} parent=0 // pred_check_branch
    %25 = sbr.rel (0) target = $region29
  $region28: #{mlp_denoiser.1} parent=0 // pred_region
    _
  $region29: #{mlp_denoiser.1} parent=0 // pred_fallthru
    _
  %v27 = vld [vmem:[%s0] sm:$0x7]
  %v28 = vld [vmem:[%s1] sm:$0xff]
  %v29 = vld [vmem:[%s1 + $0x8] sm:$0xff]
  %v30 = vld [vmem:[%s1 + $0x10] sm:$0xff]
  %v31 = vld [vmem:[%s1 + $0x18] sm:$0xff]
  %v32 = vld [vmem:[%s1 + $0x20] sm:$0xff]
  %v33 = vld [vmem:[%s1 + $0x28] sm:$0xff]
  %v34 = vld [vmem:[%s1 + $0x30] sm:$0xff]
  %v35 = vld [vmem:[%s1 + $0x38] sm:$0xff]
  %v36 = vld [vmem:[%s1 + $0x40] sm:$0xff]
  %v37 = vld [vmem:[%s1 + $0x48] sm:$0xff]
  %v38 = vld [vmem:[%s1 + $0x50] sm:$0xff]
  %v39 = vld [vmem:[%s1 + $0x58] sm:$0xff]
  %v40 = vld [vmem:[%s1 + $0x60] sm:$0xff]
  %v41 = vld [vmem:[%s1 + $0x68] sm:$0xff]
  %v42 = vld [vmem:[%s1 + $0x70] sm:$0xff]
  %v43 = vld [vmem:[%s1 + $0x78] sm:$0xff]
  %45 = vset.pattern.permute.xlu0 0
  %46 = vperm.xlu0 %45, %v28
  %v47 = vpop.permute.xlu0 %46
  %50 = vset.pattern.permute.xlu0 0
  %51 = vperm.xlu0 %50, %v29
  %v52 = vpop.permute.xlu0 %51
  %55 = vset.pattern.permute.xlu0 0
  %56 = vperm.xlu0 %55, %v30
  %v57 = vpop.permute.xlu0 %56
  %60 = vset.pattern.permute.xlu0 0
  %61 = vperm.xlu0 %60, %v31
  %v62 = vpop.permute.xlu0 %61
  %65 = vset.pattern.permute.xlu0 0
  %66 = vperm.xlu0 %65, %v32
  %v67 = vpop.permute.xlu0 %66
  %70 = vset.pattern.permute.xlu0 0
  %71 = vperm.xlu0 %70, %v33
  %v72 = vpop.permute.xlu0 %71
  %75 = vset.pattern.permute.xlu0 0
  %76 = vperm.xlu0 %75, %v34
  %v77 = vpop.permute.xlu0 %76
  %80 = vset.pattern.permute.xlu0 0
  %81 = vperm.xlu0 %80, %v35
  %v82 = vpop.permute.xlu0 %81
  %85 = vset.pattern.permute.xlu0 0
  %86 = vperm.xlu0 %85, %v36
  %v87 = vpop.permute.xlu0 %86
  %90 = vset.pattern.permute.xlu0 0
  %91 = vperm.xlu0 %90, %v37
  %v92 = vpop.permute.xlu0 %91
  %95 = vset.pattern.permute.xlu0 0
  %96 = vperm.xlu0 %95, %v38
  %v97 = vpop.permute.xlu0 %96
  %100 = vset.pattern.permute.xlu0 0
  %101 = vperm.xlu0 %100, %v39
  %v102 = vpop.permute.xlu0 %101
  %105 = vset.pattern.permute.xlu0 0
  %106 = vperm.xlu0 %105, %v40
  %v107 = vpop.permute.xlu0 %106
  %110 = vset.pattern.permute.xlu0 0
  %111 = vperm.xlu0 %110, %v41
  %v112 = vpop.permute.xlu0 %111
  %115 = vset.pattern.permute.xlu0 0
  %116 = vperm.xlu0 %115, %v42
  %v117 = vpop.permute.xlu0 %116
  %120 = vset.pattern.permute.xlu0 0
  %121 = vperm.xlu0 %120, %v43
  %v122 = vpop.permute.xlu0 %121
  %v124 = vlaneseq
  %v125 = vshrl.u32 %v124, 7
  %v126 = vsub.s32 0, %v125
  %v127 = vrot.slane %v27, %v126
  %v128 = vmul.f32 %v47, %v127
  %v129 = vmul.f32 %v52, %v127
  %v130 = vmul.f32 %v57, %v127
  %v131 = vmul.f32 %v62, %v127
  %v132 = vmul.f32 %v67, %v127
  %v133 = vmul.f32 %v72, %v127
  %v134 = vmul.f32 %v77, %v127
  %v135 = vmul.f32 %v82, %v127
  %v136 = vmul.f32 %v87, %v127
  %v137 = vmul.f32 %v92, %v127
  %v138 = vmul.f32 %v97, %v127
  %v139 = vmul.f32 %v102, %v127
  %v140 = vmul.f32 %v107, %v127
  %v141 = vmul.f32 %v112, %v127
  %v142 = vmul.f32 %v117, %v127
  %v143 = vmul.f32 %v122, %v127
  %144 = vset.pattern.permute.xlu0 1
  %145 = vperm.xlu0 %144, %v28
  %v146 = vpop.permute.xlu0 %145
  %148 = vset.pattern.permute.xlu0 1
  %149 = vperm.xlu0 %148, %v29
  %v150 = vpop.permute.xlu0 %149
  %152 = vset.pattern.permute.xlu0 1
  %153 = vperm.xlu0 %152, %v30
  %v154 = vpop.permute.xlu0 %153
  %156 = vset.pattern.permute.xlu0 1
  %157 = vperm.xlu0 %156, %v31
  %v158 = vpop.permute.xlu0 %157
  %160 = vset.pattern.permute.xlu0 1
  %161 = vperm.xlu0 %160, %v32
  %v162 = vpop.permute.xlu0 %161
  %164 = vset.pattern.permute.xlu0 1
  %165 = vperm.xlu0 %164, %v33
  %v166 = vpop.permute.xlu0 %165
  %168 = vset.pattern.permute.xlu0 1
  %169 = vperm.xlu0 %168, %v34
  %v170 = vpop.permute.xlu0 %169
  %172 = vset.pattern.permute.xlu0 1
  %173 = vperm.xlu0 %172, %v35
  %v174 = vpop.permute.xlu0 %173
  %176 = vset.pattern.permute.xlu0 1
  %177 = vperm.xlu0 %176, %v36
  %v178 = vpop.permute.xlu0 %177
  %180 = vset.pattern.permute.xlu0 1
  %181 = vperm.xlu0 %180, %v37
  %v182 = vpop.permute.xlu0 %181
  %184 = vset.pattern.permute.xlu0 1
  %185 = vperm.xlu0 %184, %v38
  %v186 = vpop.permute.xlu0 %185
  %188 = vset.pattern.permute.xlu0 1
  %189 = vperm.xlu0 %188, %v39
  %v190 = vpop.permute.xlu0 %189
  %192 = vset.pattern.permute.xlu0 1
  %193 = vperm.xlu0 %192, %v40
  %v194 = vpop.permute.xlu0 %193
  %196 = vset.pattern.permute.xlu0 1
  %197 = vperm.xlu0 %196, %v41
  %v198 = vpop.permute.xlu0 %197
  %200 = vset.pattern.permute.xlu0 1
  %201 = vperm.xlu0 %200, %v42
  %v202 = vpop.permute.xlu0 %201
  %204 = vset.pattern.permute.xlu0 1
  %205 = vperm.xlu0 %204, %v43
  %v206 = vpop.permute.xlu0 %205
  %v208 = vlaneseq
  %v209 = vshrl.u32 %v208, 7
  %v210 = vsub.s32 1, %v209
  %v211 = vrot.slane %v27, %v210
  %v212 = vmul.f32 %v146, %v211
  %v213 = vmul.f32 %v150, %v211
  %v214 = vmul.f32 %v154, %v211
  %v215 = vmul.f32 %v158, %v211
  %v216 = vmul.f32 %v162, %v211
  %v217 = vmul.f32 %v166, %v211
  %v218 = vmul.f32 %v170, %v211
  %v219 = vmul.f32 %v174, %v211
  %v220 = vmul.f32 %v178, %v211
  %v221 = vmul.f32 %v182, %v211
  %v222 = vmul.f32 %v186, %v211
  %v223 = vmul.f32 %v190, %v211
  %v224 = vmul.f32 %v194, %v211
  %v225 = vmul.f32 %v198, %v211
  %v226 = vmul.f32 %v202, %v211
  %v227 = vmul.f32 %v206, %v211
  %v228 = vadd.f32 %v128, %v212
  %v229 = vadd.f32 %v129, %v213
  %v230 = vadd.f32 %v130, %v214
  %v231 = vadd.f32 %v131, %v215
  %v232 = vadd.f32 %v132, %v216
  %v233 = vadd.f32 %v133, %v217
  %v234 = vadd.f32 %v134, %v218
  %v235 = vadd.f32 %v135, %v219
  %v236 = vadd.f32 %v136, %v220
  %v237 = vadd.f32 %v137, %v221
  %v238 = vadd.f32 %v138, %v222
  %v239 = vadd.f32 %v139, %v223
  %v240 = vadd.f32 %v140, %v224
  %v241 = vadd.f32 %v141, %v225
  %v242 = vadd.f32 %v142, %v226
  %v243 = vadd.f32 %v143, %v227
  %244 = vset.pattern.permute.xlu0 2
  %245 = vperm.xlu0 %244, %v28
  %v246 = vpop.permute.xlu0 %245
  %248 = vset.pattern.permute.xlu0 2
  %249 = vperm.xlu0 %248, %v29
  %v250 = vpop.permute.xlu0 %249
  %252 = vset.pattern.permute.xlu0 2
  %253 = vperm.xlu0 %252, %v30
  %v254 = vpop.permute.xlu0 %253
  %256 = vset.pattern.permute.xlu0 2
  %257 = vperm.xlu0 %256, %v31
  %v258 = vpop.permute.xlu0 %257
  %260 = vset.pattern.permute.xlu0 2
  %261 = vperm.xlu0 %260, %v32
  %v262 = vpop.permute.xlu0 %261
  %264 = vset.pattern.permute.xlu0 2
  %265 = vperm.xlu0 %264, %v33
  %v266 = vpop.permute.xlu0 %265
  %268 = vset.pattern.permute.xlu0 2
  %269 = vperm.xlu0 %268, %v34
  %v270 = vpop.permute.xlu0 %269
  %272 = vset.pattern.permute.xlu0 2
  %273 = vperm.xlu0 %272, %v35
  %v274 = vpop.permute.xlu0 %273
  %276 = vset.pattern.permute.xlu0 2
  %277 = vperm.xlu0 %276, %v36
  %v278 = vpop.permute.xlu0 %277
  %280 = vset.pattern.permute.xlu0 2
  %281 = vperm.xlu0 %280, %v37
  %v282 = vpop.permute.xlu0 %281
  %284 = vset.pattern.permute.xlu0 2
  %285 = vperm.xlu0 %284, %v38
  %v286 = vpop.permute.xlu0 %285
  %288 = vset.pattern.permute.xlu0 2
  %289 = vperm.xlu0 %288, %v39
  %v290 = vpop.permute.xlu0 %289
  %292 = vset.pattern.permute.xlu0 2
  %293 = vperm.xlu0 %292, %v40
  %v294 = vpop.permute.xlu0 %293
  %296 = vset.pattern.permute.xlu0 2
  %297 = vperm.xlu0 %296, %v41
  %v298 = vpop.permute.xlu0 %297
  %300 = vset.pattern.permute.xlu0 2
  %301 = vperm.xlu0 %300, %v42
  %v302 = vpop.permute.xlu0 %301
  %304 = vset.pattern.permute.xlu0 2
  %305 = vperm.xlu0 %304, %v43
  %v306 = vpop.permute.xlu0 %305
  %v308 = vlaneseq
  %v309 = vshrl.u32 %v308, 7
  %v310 = vsub.s32 2, %v309
  %v311 = vrot.slane %v27, %v310
  %v312 = vmul.f32 %v246, %v311
  %v313 = vmul.f32 %v250, %v311
  %v314 = vmul.f32 %v254, %v311
  %v315 = vmul.f32 %v258, %v311
  %v316 = vmul.f32 %v262, %v311
  %v317 = vmul.f32 %v266, %v311
  %v318 = vmul.f32 %v270, %v311
  %v319 = vmul.f32 %v274, %v311
  %v320 = vmul.f32 %v278, %v311
  %v321 = vmul.f32 %v282, %v311
  %v322 = vmul.f32 %v286, %v311
  %v323 = vmul.f32 %v290, %v311
  %v324 = vmul.f32 %v294, %v311
  %v325 = vmul.f32 %v298, %v311
  %v326 = vmul.f32 %v302, %v311
  %v327 = vmul.f32 %v306, %v311
  %v328 = vadd.f32 %v228, %v312
  %v329 = vadd.f32 %v229, %v313
  %v330 = vadd.f32 %v230, %v314
  %v331 = vadd.f32 %v231, %v315
  %v332 = vadd.f32 %v232, %v316
  %v333 = vadd.f32 %v233, %v317
  %v334 = vadd.f32 %v234, %v318
  %v335 = vadd.f32 %v235, %v319
  %v336 = vadd.f32 %v236, %v320
  %v337 = vadd.f32 %v237, %v321
  %v338 = vadd.f32 %v238, %v322
  %v339 = vadd.f32 %v239, %v323
  %v340 = vadd.f32 %v240, %v324
  %v341 = vadd.f32 %v241, %v325
  %v342 = vadd.f32 %v242, %v326
  %v343 = vadd.f32 %v243, %v327
  %v344 = vld [vmem:[%s2] sm:$0xff]
  %v345 = vld [vmem:[%s2 + $0x8] sm:$0xff]
  %v346 = vld [vmem:[%s2 + $0x10] sm:$0xff]
  %v347 = vld [vmem:[%s2 + $0x18] sm:$0xff]
  %v348 = vld [vmem:[%s2 + $0x20] sm:$0xff]
  %v349 = vld [vmem:[%s2 + $0x28] sm:$0xff]
  %v350 = vld [vmem:[%s2 + $0x30] sm:$0xff]
  %v351 = vld [vmem:[%s2 + $0x38] sm:$0xff]
  %v352 = vld [vmem:[%s2 + $0x40] sm:$0xff]
  %v353 = vld [vmem:[%s2 + $0x48] sm:$0xff]
  %v354 = vld [vmem:[%s2 + $0x50] sm:$0xff]
  %v355 = vld [vmem:[%s2 + $0x58] sm:$0xff]
  %v356 = vld [vmem:[%s2 + $0x60] sm:$0xff]
  %v357 = vld [vmem:[%s2 + $0x68] sm:$0xff]
  %v358 = vld [vmem:[%s2 + $0x70] sm:$0xff]
  %v359 = vld [vmem:[%s2 + $0x78] sm:$0xff]
  %361 = vset.pattern.permute.xlu0 0
  %362 = vperm.xlu0 %361, %v344
  %v363 = vpop.permute.xlu0 %362
  %366 = vset.pattern.permute.xlu0 0
  %367 = vperm.xlu0 %366, %v345
  %v368 = vpop.permute.xlu0 %367
  %371 = vset.pattern.permute.xlu0 0
  %372 = vperm.xlu0 %371, %v346
  %v373 = vpop.permute.xlu0 %372
  %376 = vset.pattern.permute.xlu0 0
  %377 = vperm.xlu0 %376, %v347
  %v378 = vpop.permute.xlu0 %377
  %381 = vset.pattern.permute.xlu0 0
  %382 = vperm.xlu0 %381, %v348
  %v383 = vpop.permute.xlu0 %382
  %386 = vset.pattern.permute.xlu0 0
  %387 = vperm.xlu0 %386, %v349
  %v388 = vpop.permute.xlu0 %387
  %391 = vset.pattern.permute.xlu0 0
  %392 = vperm.xlu0 %391, %v350
  %v393 = vpop.permute.xlu0 %392
  %396 = vset.pattern.permute.xlu0 0
  %397 = vperm.xlu0 %396, %v351
  %v398 = vpop.permute.xlu0 %397
  %401 = vset.pattern.permute.xlu0 0
  %402 = vperm.xlu0 %401, %v352
  %v403 = vpop.permute.xlu0 %402
  %406 = vset.pattern.permute.xlu0 0
  %407 = vperm.xlu0 %406, %v353
  %v408 = vpop.permute.xlu0 %407
  %411 = vset.pattern.permute.xlu0 0
  %412 = vperm.xlu0 %411, %v354
  %v413 = vpop.permute.xlu0 %412
  %416 = vset.pattern.permute.xlu0 0
  %417 = vperm.xlu0 %416, %v355
  %v418 = vpop.permute.xlu0 %417
  %421 = vset.pattern.permute.xlu0 0
  %422 = vperm.xlu0 %421, %v356
  %v423 = vpop.permute.xlu0 %422
  %426 = vset.pattern.permute.xlu0 0
  %427 = vperm.xlu0 %426, %v357
  %v428 = vpop.permute.xlu0 %427
  %431 = vset.pattern.permute.xlu0 0
  %432 = vperm.xlu0 %431, %v358
  %v433 = vpop.permute.xlu0 %432
  %436 = vset.pattern.permute.xlu0 0
  %437 = vperm.xlu0 %436, %v359
  %v438 = vpop.permute.xlu0 %437
  %v440 = vadd.f32 %v328, %v363
  %v441 = vadd.f32 %v329, %v368
  %v442 = vadd.f32 %v330, %v373
  %v443 = vadd.f32 %v331, %v378
  %v444 = vadd.f32 %v332, %v383
  %v445 = vadd.f32 %v333, %v388
  %v446 = vadd.f32 %v334, %v393
  %v447 = vadd.f32 %v335, %v398
  %v448 = vadd.f32 %v336, %v403
  %v449 = vadd.f32 %v337, %v408
  %v450 = vadd.f32 %v338, %v413
  %v451 = vadd.f32 %v339, %v418
  %v452 = vadd.f32 %v340, %v423
  %v453 = vadd.f32 %v341, %v428
  %v454 = vadd.f32 %v342, %v433
  %v455 = vadd.f32 %v343, %v438
  %v456 = vpack.c.bf16 %v441, %v440
  %v457 = vpack.c.bf16 %v443, %v442
  %v458 = vpack.c.bf16 %v445, %v444
  %v459 = vpack.c.bf16 %v447, %v446
  %v460 = vpack.c.bf16 %v449, %v448
  %v461 = vpack.c.bf16 %v451, %v450
  %v462 = vpack.c.bf16 %v453, %v452
  %v463 = vpack.c.bf16 %v455, %v454
  %v464 = vld [vmem:[%s3] sm:$0xf]
  %v465 = vld [vmem:[%s3 + $0x4] sm:$0xf]
  %v466 = vld [vmem:[%s3 + $0x8] sm:$0xf]
  %v467 = vld [vmem:[%s3 + $0xc] sm:$0xf]
  %v468 = vld [vmem:[%s3 + $0x10] sm:$0xf]
  %v469 = vld [vmem:[%s3 + $0x14] sm:$0xf]
  %v470 = vld [vmem:[%s3 + $0x18] sm:$0xf]
  %v471 = vld [vmem:[%s3 + $0x1c] sm:$0xf]
  %v472 = vld [vmem:[%s3 + $0x20] sm:$0xf]
  %v473 = vld [vmem:[%s3 + $0x24] sm:$0xf]
  %v474 = vld [vmem:[%s3 + $0x28] sm:$0xf]
  %v475 = vld [vmem:[%s3 + $0x2c] sm:$0xf]
  %v476 = vld [vmem:[%s3 + $0x30] sm:$0xf]
  %v477 = vld [vmem:[%s3 + $0x34] sm:$0xf]
  %v478 = vld [vmem:[%s3 + $0x38] sm:$0xf]
  %v479 = vld [vmem:[%s3 + $0x3c] sm:$0xf]
  %v480 = vld [vmem:[%s4] sm:$0xff]
  %v481 = vld [vmem:[%s4 + $0x8] sm:$0xff]
  %v482 = vld [vmem:[%s4 + $0x10] sm:$0xff]
  %v483 = vld [vmem:[%s4 + $0x18] sm:$0xff]
  %v484 = vld [vmem:[%s4 + $0x20] sm:$0xff]
  %v485 = vld [vmem:[%s4 + $0x28] sm:$0xff]
  %v486 = vld [vmem:[%s4 + $0x30] sm:$0xff]
  %v487 = vld [vmem:[%s4 + $0x38] sm:$0xff]
  %v488 = vld [vmem:[%s4 + $0x40] sm:$0xff]
  %v489 = vld [vmem:[%s4 + $0x48] sm:$0xff]
  %v490 = vld [vmem:[%s4 + $0x50] sm:$0xff]
  %v491 = vld [vmem:[%s4 + $0x58] sm:$0xff]
  %v492 = vld [vmem:[%s4 + $0x60] sm:$0xff]
  %v493 = vld [vmem:[%s4 + $0x68] sm:$0xff]
  %v494 = vld [vmem:[%s4 + $0x70] sm:$0xff]
  %v495 = vld [vmem:[%s4 + $0x78] sm:$0xff]
  %497 = vset.pattern.permute.xlu0 0
  %498 = vperm.xlu0 %497, %v480
  %v499 = vpop.permute.xlu0 %498
  %502 = vset.pattern.permute.xlu0 0
  %503 = vperm.xlu0 %502, %v481
  %v504 = vpop.permute.xlu0 %503
  %507 = vset.pattern.permute.xlu0 0
  %508 = vperm.xlu0 %507, %v482
  %v509 = vpop.permute.xlu0 %508
  %512 = vset.pattern.permute.xlu0 0
  %513 = vperm.xlu0 %512, %v483
  %v514 = vpop.permute.xlu0 %513
  %517 = vset.pattern.permute.xlu0 0
  %518 = vperm.xlu0 %517, %v484
  %v519 = vpop.permute.xlu0 %518
  %522 = vset.pattern.permute.xlu0 0
  %523 = vperm.xlu0 %522, %v485
  %v524 = vpop.permute.xlu0 %523
  %527 = vset.pattern.permute.xlu0 0
  %528 = vperm.xlu0 %527, %v486
  %v529 = vpop.permute.xlu0 %528
  %532 = vset.pattern.permute.xlu0 0
  %533 = vperm.xlu0 %532, %v487
  %v534 = vpop.permute.xlu0 %533
  %537 = vset.pattern.permute.xlu0 0
  %538 = vperm.xlu0 %537, %v488
  %v539 = vpop.permute.xlu0 %538
  %542 = vset.pattern.permute.xlu0 0
  %543 = vperm.xlu0 %542, %v489
  %v544 = vpop.permute.xlu0 %543
  %547 = vset.pattern.permute.xlu0 0
  %548 = vperm.xlu0 %547, %v490
  %v549 = vpop.permute.xlu0 %548
  %552 = vset.pattern.permute.xlu0 0
  %553 = vperm.xlu0 %552, %v491
  %v554 = vpop.permute.xlu0 %553
  %557 = vset.pattern.permute.xlu0 0
  %558 = vperm.xlu0 %557, %v492
  %v559 = vpop.permute.xlu0 %558
  %562 = vset.pattern.permute.xlu0 0
  %563 = vperm.xlu0 %562, %v493
  %v564 = vpop.permute.xlu0 %563
  %567 = vset.pattern.permute.xlu0 0
  %568 = vperm.xlu0 %567, %v494
  %v569 = vpop.permute.xlu0 %568
  %572 = vset.pattern.permute.xlu0 0
  %573 = vperm.xlu0 %572, %v495
  %v574 = vpop.permute.xlu0 %573
  %v592 = vunpack.c.l.b16 %v464
  %v593 = vunpack.c.l.b16 %v465
  %v594 = vunpack.c.l.b16 %v466
  %v595 = vunpack.c.l.b16 %v467
  %v596 = vunpack.c.l.b16 %v468
  %v597 = vunpack.c.l.b16 %v469
  %v598 = vunpack.c.l.b16 %v470
  %v599 = vunpack.c.l.b16 %v471
  %v600 = vunpack.c.l.b16 %v472
  %v601 = vunpack.c.l.b16 %v473
  %v602 = vunpack.c.l.b16 %v474
  %v603 = vunpack.c.l.b16 %v475
  %v604 = vunpack.c.l.b16 %v476
  %v605 = vunpack.c.l.b16 %v477
  %v606 = vunpack.c.l.b16 %v478
  %v607 = vunpack.c.l.b16 %v479
  %v608 = vpack.c.b16 %v593, %v592
  %v609 = vpack.c.b16 %v595, %v594
  %v610 = vpack.c.b16 %v597, %v596
  %v611 = vpack.c.b16 %v599, %v598
  %v612 = vpack.c.b16 %v601, %v600
  %v613 = vpack.c.b16 %v603, %v602
  %v614 = vpack.c.b16 %v605, %v604
  %v615 = vpack.c.b16 %v607, %v606
  %624 = vmatprep.subr.bf16.mxu0 0
  %625 = vmatpush1.bf16.msra.mxu0 %v463
  %626 = vmatprep.subr.bf16.mxu0 0
  %627 = vmatpush1.bf16.msra.mxu0 %v462
  %628 = vmatprep.subr.bf16.mxu0 0
  %629 = vmatpush1.bf16.msra.mxu0 %v461
  %630 = vmatprep.subr.bf16.mxu0 0
  %631 = vmatpush1.bf16.msra.mxu0 %v460
  %632 = vmatprep.subr.bf16.mxu0 0
  %633 = vmatpush1.bf16.msra.mxu0 %v459
  %634 = vmatprep.subr.bf16.mxu0 0
  %635 = vmatpush1.bf16.msra.mxu0 %v458
  %636 = vmatprep.subr.bf16.mxu0 0
  %637 = vmatpush1.bf16.msra.mxu0 %v457
  %638 = vmatprep.subr.bf16.mxu0 0
  %639 = vmatpush1.bf16.msra.mxu0 %v456
  %640 = vmatprep.subr.bf16.mxu0 0
  %641 = vmatpush2.bf16.msra.mxu0 0
  %642 = vmatprep.subr.bf16.mxu0 0
  %643 = vmatpush2.bf16.msra.mxu0 0
  %644 = vmatprep.subr.bf16.mxu0 0
  %645 = vmatpush2.bf16.msra.mxu0 0
  %646 = vmatprep.subr.bf16.mxu0 0
  %647 = vmatpush2.bf16.msra.mxu0 0
  %648 = vmatprep.subr.bf16.mxu0 0
  %649 = vmatpush2.bf16.msra.mxu0 0
  %650 = vmatprep.subr.bf16.mxu0 0
  %651 = vmatpush2.bf16.msra.mxu0 0
  %652 = vmatprep.subr.bf16.mxu0 0
  %653 = vmatpush2.bf16.msra.mxu0 0
  %654 = vmatprep.subr.bf16.mxu0 0
  %655 = vmatpush2.bf16.msra.mxu0 0
  %656 = vmatprep.mubr.bf16.mxu0 0
  %657 = vmatmul.mubr.bf16.gmra.mxu0 %v608
  %v658 = vpop.f32.mrf.mxu0
  %v659 = vadd.f32 %v499, %v658
  %v660 = vpop.f32.mrf.mxu0
  %v661 = vpop.f32.mrf.mxu0
  %v662 = vadd.f32 %v504, %v661
  %v663 = vpop.f32.mrf.mxu0
  %664 = vmatprep.mubr.bf16.mxu0 0
  %665 = vmatmul.mubr.bf16.gmra.mxu0 %v609
  %v666 = vpop.f32.mrf.mxu0
  %v667 = vadd.f32 %v509, %v666
  %v668 = vpop.f32.mrf.mxu0
  %v669 = vpop.f32.mrf.mxu0
  %v670 = vadd.f32 %v514, %v669
  %v671 = vpop.f32.mrf.mxu0
  %672 = vmatprep.mubr.bf16.mxu0 0
  %673 = vmatmul.mubr.bf16.gmra.mxu0 %v610
  %v674 = vpop.f32.mrf.mxu0
  %v675 = vadd.f32 %v519, %v674
  %v676 = vpop.f32.mrf.mxu0
  %v677 = vpop.f32.mrf.mxu0
  %v678 = vadd.f32 %v524, %v677
  %v679 = vpop.f32.mrf.mxu0
  %680 = vmatprep.mubr.bf16.mxu0 0
  %681 = vmatmul.mubr.bf16.gmra.mxu0 %v611
  %v682 = vpop.f32.mrf.mxu0
  %v683 = vadd.f32 %v529, %v682
  %v684 = vpop.f32.mrf.mxu0
  %v685 = vpop.f32.mrf.mxu0
  %v686 = vadd.f32 %v534, %v685
  %v687 = vpop.f32.mrf.mxu0
  %688 = vmatprep.mubr.bf16.mxu0 0
  %689 = vmatmul.mubr.bf16.gmra.mxu0 %v612
  %v690 = vpop.f32.mrf.mxu0
  %v691 = vadd.f32 %v539, %v690
  %v692 = vpop.f32.mrf.mxu0
  %v693 = vpop.f32.mrf.mxu0
  %v694 = vadd.f32 %v544, %v693
  %v695 = vpop.f32.mrf.mxu0
  %696 = vmatprep.mubr.bf16.mxu0 0
  %697 = vmatmul.mubr.bf16.gmra.mxu0 %v613
  %v698 = vpop.f32.mrf.mxu0
  %v699 = vadd.f32 %v549, %v698
  %v700 = vpop.f32.mrf.mxu0
  %v701 = vpop.f32.mrf.mxu0
  %v702 = vadd.f32 %v554, %v701
  %v703 = vpop.f32.mrf.mxu0
  %704 = vmatprep.mubr.bf16.mxu0 0
  %705 = vmatmul.mubr.bf16.gmra.mxu0 %v614
  %v706 = vpop.f32.mrf.mxu0
  %v707 = vadd.f32 %v559, %v706
  %v708 = vpop.f32.mrf.mxu0
  %v709 = vpop.f32.mrf.mxu0
  %v710 = vadd.f32 %v564, %v709
  %v711 = vpop.f32.mrf.mxu0
  %712 = vmatprep.mubr.bf16.mxu0 0
  %713 = vmatmul.mubr.bf16.gmra.mxu0 %v615
  %v714 = vpop.f32.mrf.mxu0
  %v715 = vadd.f32 %v569, %v714
  %v716 = vpop.f32.mrf.mxu0
  %v717 = vpop.f32.mrf.mxu0
  %v718 = vadd.f32 %v574, %v717
  %v719 = vpop.f32.mrf.mxu0
  %720 = vdwg.mxu0
  %v721 = vmul.f32 %v659, 0.01
  %v722 = vmul.f32 %v662, 0.01
  %v723 = vmul.f32 %v667, 0.01
  %v724 = vmul.f32 %v670, 0.01
  %v725 = vmul.f32 %v675, 0.01
  %v726 = vmul.f32 %v678, 0.01
  %v727 = vmul.f32 %v683, 0.01
  %v728 = vmul.f32 %v686, 0.01
  %v729 = vmul.f32 %v691, 0.01
  %v730 = vmul.f32 %v694, 0.01
  %v731 = vmul.f32 %v699, 0.01
  %v732 = vmul.f32 %v702, 0.01
  %v733 = vmul.f32 %v707, 0.01
  %v734 = vmul.f32 %v710, 0.01
  %v735 = vmul.f32 %v715, 0.01
  %v736 = vmul.f32 %v718, 0.01
  %v737 = vmax.f32 %v659, %v721
  %v738 = vmax.f32 %v662, %v722
  %v739 = vmax.f32 %v667, %v723
  %v740 = vmax.f32 %v670, %v724
  %v741 = vmax.f32 %v675, %v725
  %v742 = vmax.f32 %v678, %v726
  %v743 = vmax.f32 %v683, %v727
  %v744 = vmax.f32 %v686, %v728
  %v745 = vmax.f32 %v691, %v729
  %v746 = vmax.f32 %v694, %v730
  %v747 = vmax.f32 %v699, %v731
  %v748 = vmax.f32 %v702, %v732
  %v749 = vmax.f32 %v707, %v733
  %v750 = vmax.f32 %v710, %v734
  %v751 = vmax.f32 %v715, %v735
  %v752 = vmax.f32 %v718, %v736
  %v753 = vpack.c.bf16 %v738, %v737
  %v754 = vpack.c.bf16 %v740, %v739
  %v755 = vpack.c.bf16 %v742, %v741
  %v756 = vpack.c.bf16 %v744, %v743
  %v757 = vpack.c.bf16 %v746, %v745
  %v758 = vpack.c.bf16 %v748, %v747
  %v759 = vpack.c.bf16 %v750, %v749
  %v760 = vpack.c.bf16 %v752, %v751
  %s761 = scalar_lea.vmem %s3, 64
  %v762 = vld [vmem:[%s761] sm:$0xf]
  %v763 = vld [vmem:[%s761 + $0x4] sm:$0xf]
  %v764 = vld [vmem:[%s761 + $0x8] sm:$0xf]
  %v765 = vld [vmem:[%s761 + $0xc] sm:$0xf]
  %v766 = vld [vmem:[%s761 + $0x10] sm:$0xf]
  %v767 = vld [vmem:[%s761 + $0x14] sm:$0xf]
  %v768 = vld [vmem:[%s761 + $0x18] sm:$0xf]
  %v769 = vld [vmem:[%s761 + $0x1c] sm:$0xf]
  %v770 = vld [vmem:[%s761 + $0x20] sm:$0xf]
  %v771 = vld [vmem:[%s761 + $0x24] sm:$0xf]
  %v772 = vld [vmem:[%s761 + $0x28] sm:$0xf]
  %v773 = vld [vmem:[%s761 + $0x2c] sm:$0xf]
  %v774 = vld [vmem:[%s761 + $0x30] sm:$0xf]
  %v775 = vld [vmem:[%s761 + $0x34] sm:$0xf]
  %v776 = vld [vmem:[%s761 + $0x38] sm:$0xf]
  %v777 = vld [vmem:[%s761 + $0x3c] sm:$0xf]
  %s778 = scalar_lea.vmem %s4, 128
  %v779 = vld [vmem:[%s778] sm:$0xff]
  %v780 = vld [vmem:[%s778 + $0x8] sm:$0xff]
  %v781 = vld [vmem:[%s778 + $0x10] sm:$0xff]
  %v782 = vld [vmem:[%s778 + $0x18] sm:$0xff]
  %v783 = vld [vmem:[%s778 + $0x20] sm:$0xff]
  %v784 = vld [vmem:[%s778 + $0x28] sm:$0xff]
  %v785 = vld [vmem:[%s778 + $0x30] sm:$0xff]
  %v786 = vld [vmem:[%s778 + $0x38] sm:$0xff]
  %v787 = vld [vmem:[%s778 + $0x40] sm:$0xff]
  %v788 = vld [vmem:[%s778 + $0x48] sm:$0xff]
  %v789 = vld [vmem:[%s778 + $0x50] sm:$0xff]
  %v790 = vld [vmem:[%s778 + $0x58] sm:$0xff]
  %v791 = vld [vmem:[%s778 + $0x60] sm:$0xff]
  %v792 = vld [vmem:[%s778 + $0x68] sm:$0xff]
  %v793 = vld [vmem:[%s778 + $0x70] sm:$0xff]
  %v794 = vld [vmem:[%s778 + $0x78] sm:$0xff]
  %796 = vset.pattern.permute.xlu0 0
  %797 = vperm.xlu0 %796, %v779
  %v798 = vpop.permute.xlu0 %797
  %801 = vset.pattern.permute.xlu0 0
  %802 = vperm.xlu0 %801, %v780
  %v803 = vpop.permute.xlu0 %802
  %806 = vset.pattern.permute.xlu0 0
  %807 = vperm.xlu0 %806, %v781
  %v808 = vpop.permute.xlu0 %807
  %811 = vset.pattern.permute.xlu0 0
  %812 = vperm.xlu0 %811, %v782
  %v813 = vpop.permute.xlu0 %812
  %816 = vset.pattern.permute.xlu0 0
  %817 = vperm.xlu0 %816, %v783
  %v818 = vpop.permute.xlu0 %817
  %821 = vset.pattern.permute.xlu0 0
  %822 = vperm.xlu0 %821, %v784
  %v823 = vpop.permute.xlu0 %822
  %826 = vset.pattern.permute.xlu0 0
  %827 = vperm.xlu0 %826, %v785
  %v828 = vpop.permute.xlu0 %827
  %831 = vset.pattern.permute.xlu0 0
  %832 = vperm.xlu0 %831, %v786
  %v833 = vpop.permute.xlu0 %832
  %836 = vset.pattern.permute.xlu0 0
  %837 = vperm.xlu0 %836, %v787
  %v838 = vpop.permute.xlu0 %837
  %841 = vset.pattern.permute.xlu0 0
  %842 = vperm.xlu0 %841, %v788
  %v843 = vpop.permute.xlu0 %842
  %846 = vset.pattern.permute.xlu0 0
  %847 = vperm.xlu0 %846, %v789
  %v848 = vpop.permute.xlu0 %847
  %851 = vset.pattern.permute.xlu0 0
  %852 = vperm.xlu0 %851, %v790
  %v853 = vpop.permute.xlu0 %852
  %856 = vset.pattern.permute.xlu0 0
  %857 = vperm.xlu0 %856, %v791
  %v858 = vpop.permute.xlu0 %857
  %861 = vset.pattern.permute.xlu0 0
  %862 = vperm.xlu0 %861, %v792
  %v863 = vpop.permute.xlu0 %862
  %866 = vset.pattern.permute.xlu0 0
  %867 = vperm.xlu0 %866, %v793
  %v868 = vpop.permute.xlu0 %867
  %871 = vset.pattern.permute.xlu0 0
  %872 = vperm.xlu0 %871, %v794
  %v873 = vpop.permute.xlu0 %872
  %v891 = vunpack.c.l.b16 %v762
  %v892 = vunpack.c.l.b16 %v763
  %v893 = vunpack.c.l.b16 %v764
  %v894 = vunpack.c.l.b16 %v765
  %v895 = vunpack.c.l.b16 %v766
  %v896 = vunpack.c.l.b16 %v767
  %v897 = vunpack.c.l.b16 %v768
  %v898 = vunpack.c.l.b16 %v769
  %v899 = vunpack.c.l.b16 %v770
  %v900 = vunpack.c.l.b16 %v771
  %v901 = vunpack.c.l.b16 %v772
  %v902 = vunpack.c.l.b16 %v773
  %v903 = vunpack.c.l.b16 %v774
  %v904 = vunpack.c.l.b16 %v775
  %v905 = vunpack.c.l.b16 %v776
  %v906 = vunpack.c.l.b16 %v777
  %v907 = vpack.c.b16 %v892, %v891
  %v908 = vpack.c.b16 %v894, %v893
  %v909 = vpack.c.b16 %v896, %v895
  %v910 = vpack.c.b16 %v898, %v897
  %v911 = vpack.c.b16 %v900, %v899
  %v912 = vpack.c.b16 %v902, %v901
  %v913 = vpack.c.b16 %v904, %v903
  %v914 = vpack.c.b16 %v906, %v905
  %923 = vmatprep.subr.bf16.mxu0 0
  %924 = vmatpush1.bf16.msra.mxu0 %v760
  %925 = vmatprep.subr.bf16.mxu0 0
  %926 = vmatpush1.bf16.msra.mxu0 %v759
  %927 = vmatprep.subr.bf16.mxu0 0
  %928 = vmatpush1.bf16.msra.mxu0 %v758
  %929 = vmatprep.subr.bf16.mxu0 0
  %930 = vmatpush1.bf16.msra.mxu0 %v757
  %931 = vmatprep.subr.bf16.mxu0 0
  %932 = vmatpush1.bf16.msra.mxu0 %v756
  %933 = vmatprep.subr.bf16.mxu0 0
  %934 = vmatpush1.bf16.msra.mxu0 %v755
  %935 = vmatprep.subr.bf16.mxu0 0
  %936 = vmatpush1.bf16.msra.mxu0 %v754
  %937 = vmatprep.subr.bf16.mxu0 0
  %938 = vmatpush1.bf16.msra.mxu0 %v753
  %939 = vmatprep.subr.bf16.mxu0 0
  %940 = vmatpush2.bf16.msra.mxu0 0
  %941 = vmatprep.subr.bf16.mxu0 0
  %942 = vmatpush2.bf16.msra.mxu0 0
  %943 = vmatprep.subr.bf16.mxu0 0
  %944 = vmatpush2.bf16.msra.mxu0 0
  %945 = vmatprep.subr.bf16.mxu0 0
  %946 = vmatpush2.bf16.msra.mxu0 0
  %947 = vmatprep.subr.bf16.mxu0 0
  %948 = vmatpush2.bf16.msra.mxu0 0
  %949 = vmatprep.subr.bf16.mxu0 0
  %950 = vmatpush2.bf16.msra.mxu0 0
  %951 = vmatprep.subr.bf16.mxu0 0
  %952 = vmatpush2.bf16.msra.mxu0 0
  %953 = vmatprep.subr.bf16.mxu0 0
  %954 = vmatpush2.bf16.msra.mxu0 0
  %955 = vmatprep.mubr.bf16.mxu0 0
  %956 = vmatmul.mubr.bf16.gmra.mxu0 %v907
  %v957 = vpop.f32.mrf.mxu0
  %v958 = vadd.f32 %v798, %v957
  %v959 = vpop.f32.mrf.mxu0
  %v960 = vpop.f32.mrf.mxu0
  %v961 = vadd.f32 %v803, %v960
  %v962 = vpop.f32.mrf.mxu0
  %963 = vmatprep.mubr.bf16.mxu0 0
  %964 = vmatmul.mubr.bf16.gmra.mxu0 %v908
  %v965 = vpop.f32.mrf.mxu0
  %v966 = vadd.f32 %v808, %v965
  %v967 = vpop.f32.mrf.mxu0
  %v968 = vpop.f32.mrf.mxu0
  %v969 = vadd.f32 %v813, %v968
  %v970 = vpop.f32.mrf.mxu0
  %971 = vmatprep.mubr.bf16.mxu0 0
  %972 = vmatmul.mubr.bf16.gmra.mxu0 %v909
  %v973 = vpop.f32.mrf.mxu0
  %v974 = vadd.f32 %v818, %v973
  %v975 = vpop.f32.mrf.mxu0
  %v976 = vpop.f32.mrf.mxu0
  %v977 = vadd.f32 %v823, %v976
  %v978 = vpop.f32.mrf.mxu0
  %979 = vmatprep.mubr.bf16.mxu0 0
  %980 = vmatmul.mubr.bf16.gmra.mxu0 %v910
  %v981 = vpop.f32.mrf.mxu0
  %v982 = vadd.f32 %v828, %v981
  %v983 = vpop.f32.mrf.mxu0
  %v984 = vpop.f32.mrf.mxu0
  %v985 = vadd.f32 %v833, %v984
  %v986 = vpop.f32.mrf.mxu0
  %987 = vmatprep.mubr.bf16.mxu0 0
  %988 = vmatmul.mubr.bf16.gmra.mxu0 %v911
  %v989 = vpop.f32.mrf.mxu0
  %v990 = vadd.f32 %v838, %v989
  %v991 = vpop.f32.mrf.mxu0
  %v992 = vpop.f32.mrf.mxu0
  %v993 = vadd.f32 %v843, %v992
  %v994 = vpop.f32.mrf.mxu0
  %995 = vmatprep.mubr.bf16.mxu0 0
  %996 = vmatmul.mubr.bf16.gmra.mxu0 %v912
  %v997 = vpop.f32.mrf.mxu0
  %v998 = vadd.f32 %v848, %v997
  %v999 = vpop.f32.mrf.mxu0
  %v1000 = vpop.f32.mrf.mxu0
  %v1001 = vadd.f32 %v853, %v1000
  %v1002 = vpop.f32.mrf.mxu0
  %1003 = vmatprep.mubr.bf16.mxu0 0
  %1004 = vmatmul.mubr.bf16.gmra.mxu0 %v913
  %v1005 = vpop.f32.mrf.mxu0
  %v1006 = vadd.f32 %v858, %v1005
  %v1007 = vpop.f32.mrf.mxu0
  %v1008 = vpop.f32.mrf.mxu0
  %v1009 = vadd.f32 %v863, %v1008
  %v1010 = vpop.f32.mrf.mxu0
  %1011 = vmatprep.mubr.bf16.mxu0 0
  %1012 = vmatmul.mubr.bf16.gmra.mxu0 %v914
  %v1013 = vpop.f32.mrf.mxu0
  %v1014 = vadd.f32 %v868, %v1013
  %v1015 = vpop.f32.mrf.mxu0
  %v1016 = vpop.f32.mrf.mxu0
  %v1017 = vadd.f32 %v873, %v1016
  %v1018 = vpop.f32.mrf.mxu0
  %1019 = vdwg.mxu0
  %v1020 = vmul.f32 %v958, 0.01
  %v1021 = vmul.f32 %v961, 0.01
  %v1022 = vmul.f32 %v966, 0.01
  %v1023 = vmul.f32 %v969, 0.01
  %v1024 = vmul.f32 %v974, 0.01
  %v1025 = vmul.f32 %v977, 0.01
  %v1026 = vmul.f32 %v982, 0.01
  %v1027 = vmul.f32 %v985, 0.01
  %v1028 = vmul.f32 %v990, 0.01
  %v1029 = vmul.f32 %v993, 0.01
  %v1030 = vmul.f32 %v998, 0.01
  %v1031 = vmul.f32 %v1001, 0.01
  %v1032 = vmul.f32 %v1006, 0.01
  %v1033 = vmul.f32 %v1009, 0.01
  %v1034 = vmul.f32 %v1014, 0.01
  %v1035 = vmul.f32 %v1017, 0.01
  %v1036 = vmax.f32 %v958, %v1020
  %v1037 = vmax.f32 %v961, %v1021
  %v1038 = vmax.f32 %v966, %v1022
  %v1039 = vmax.f32 %v969, %v1023
  %v1040 = vmax.f32 %v974, %v1024
  %v1041 = vmax.f32 %v977, %v1025
  %v1042 = vmax.f32 %v982, %v1026
  %v1043 = vmax.f32 %v985, %v1027
  %v1044 = vmax.f32 %v990, %v1028
  %v1045 = vmax.f32 %v993, %v1029
  %v1046 = vmax.f32 %v998, %v1030
  %v1047 = vmax.f32 %v1001, %v1031
  %v1048 = vmax.f32 %v1006, %v1032
  %v1049 = vmax.f32 %v1009, %v1033
  %v1050 = vmax.f32 %v1014, %v1034
  %v1051 = vmax.f32 %v1017, %v1035
  %v1052 = vpack.c.bf16 %v1037, %v1036
  %v1053 = vpack.c.bf16 %v1039, %v1038
  %v1054 = vpack.c.bf16 %v1041, %v1040
  %v1055 = vpack.c.bf16 %v1043, %v1042
  %v1056 = vpack.c.bf16 %v1045, %v1044
  %v1057 = vpack.c.bf16 %v1047, %v1046
  %v1058 = vpack.c.bf16 %v1049, %v1048
  %v1059 = vpack.c.bf16 %v1051, %v1050
  %s1060 = scalar_lea.vmem %s3, 128
  %v1061 = vld [vmem:[%s1060] sm:$0xf]
  %v1062 = vld [vmem:[%s1060 + $0x4] sm:$0xf]
  %v1063 = vld [vmem:[%s1060 + $0x8] sm:$0xf]
  %v1064 = vld [vmem:[%s1060 + $0xc] sm:$0xf]
  %v1065 = vld [vmem:[%s1060 + $0x10] sm:$0xf]
  %v1066 = vld [vmem:[%s1060 + $0x14] sm:$0xf]
  %v1067 = vld [vmem:[%s1060 + $0x18] sm:$0xf]
  %v1068 = vld [vmem:[%s1060 + $0x1c] sm:$0xf]
  %v1069 = vld [vmem:[%s1060 + $0x20] sm:$0xf]
  %v1070 = vld [vmem:[%s1060 + $0x24] sm:$0xf]
  %v1071 = vld [vmem:[%s1060 + $0x28] sm:$0xf]
  %v1072 = vld [vmem:[%s1060 + $0x2c] sm:$0xf]
  %v1073 = vld [vmem:[%s1060 + $0x30] sm:$0xf]
  %v1074 = vld [vmem:[%s1060 + $0x34] sm:$0xf]
  %v1075 = vld [vmem:[%s1060 + $0x38] sm:$0xf]
  %v1076 = vld [vmem:[%s1060 + $0x3c] sm:$0xf]
  %s1077 = scalar_lea.vmem %s4, 256
  %v1078 = vld [vmem:[%s1077] sm:$0xff]
  %v1079 = vld [vmem:[%s1077 + $0x8] sm:$0xff]
  %v1080 = vld [vmem:[%s1077 + $0x10] sm:$0xff]
  %v1081 = vld [vmem:[%s1077 + $0x18] sm:$0xff]
  %v1082 = vld [vmem:[%s1077 + $0x20] sm:$0xff]
  %v1083 = vld [vmem:[%s1077 + $0x28] sm:$0xff]
  %v1084 = vld [vmem:[%s1077 + $0x30] sm:$0xff]
  %v1085 = vld [vmem:[%s1077 + $0x38] sm:$0xff]
  %v1086 = vld [vmem:[%s1077 + $0x40] sm:$0xff]
  %v1087 = vld [vmem:[%s1077 + $0x48] sm:$0xff]
  %v1088 = vld [vmem:[%s1077 + $0x50] sm:$0xff]
  %v1089 = vld [vmem:[%s1077 + $0x58] sm:$0xff]
  %v1090 = vld [vmem:[%s1077 + $0x60] sm:$0xff]
  %v1091 = vld [vmem:[%s1077 + $0x68] sm:$0xff]
  %v1092 = vld [vmem:[%s1077 + $0x70] sm:$0xff]
  %v1093 = vld [vmem:[%s1077 + $0x78] sm:$0xff]
  %1095 = vset.pattern.permute.xlu0 0
  %1096 = vperm.xlu0 %1095, %v1078
  %v1097 = vpop.permute.xlu0 %1096
  %1100 = vset.pattern.permute.xlu0 0
  %1101 = vperm.xlu0 %1100, %v1079
  %v1102 = vpop.permute.xlu0 %1101
  %1105 = vset.pattern.permute.xlu0 0
  %1106 = vperm.xlu0 %1105, %v1080
  %v1107 = vpop.permute.xlu0 %1106
  %1110 = vset.pattern.permute.xlu0 0
  %1111 = vperm.xlu0 %1110, %v1081
  %v1112 = vpop.permute.xlu0 %1111
  %1115 = vset.pattern.permute.xlu0 0
  %1116 = vperm.xlu0 %1115, %v1082
  %v1117 = vpop.permute.xlu0 %1116
  %1120 = vset.pattern.permute.xlu0 0
  %1121 = vperm.xlu0 %1120, %v1083
  %v1122 = vpop.permute.xlu0 %1121
  %1125 = vset.pattern.permute.xlu0 0
  %1126 = vperm.xlu0 %1125, %v1084
  %v1127 = vpop.permute.xlu0 %1126
  %1130 = vset.pattern.permute.xlu0 0
  %1131 = vperm.xlu0 %1130, %v1085
  %v1132 = vpop.permute.xlu0 %1131
  %1135 = vset.pattern.permute.xlu0 0
  %1136 = vperm.xlu0 %1135, %v1086
  %v1137 = vpop.permute.xlu0 %1136
  %1140 = vset.pattern.permute.xlu0 0
  %1141 = vperm.xlu0 %1140, %v1087
  %v1142 = vpop.permute.xlu0 %1141
  %1145 = vset.pattern.permute.xlu0 0
  %1146 = vperm.xlu0 %1145, %v1088
  %v1147 = vpop.permute.xlu0 %1146
  %1150 = vset.pattern.permute.xlu0 0
  %1151 = vperm.xlu0 %1150, %v1089
  %v1152 = vpop.permute.xlu0 %1151
  %1155 = vset.pattern.permute.xlu0 0
  %1156 = vperm.xlu0 %1155, %v1090
  %v1157 = vpop.permute.xlu0 %1156
  %1160 = vset.pattern.permute.xlu0 0
  %1161 = vperm.xlu0 %1160, %v1091
  %v1162 = vpop.permute.xlu0 %1161
  %1165 = vset.pattern.permute.xlu0 0
  %1166 = vperm.xlu0 %1165, %v1092
  %v1167 = vpop.permute.xlu0 %1166
  %1170 = vset.pattern.permute.xlu0 0
  %1171 = vperm.xlu0 %1170, %v1093
  %v1172 = vpop.permute.xlu0 %1171
  %v1190 = vunpack.c.l.b16 %v1061
  %v1191 = vunpack.c.l.b16 %v1062
  %v1192 = vunpack.c.l.b16 %v1063
  %v1193 = vunpack.c.l.b16 %v1064
  %v1194 = vunpack.c.l.b16 %v1065
  %v1195 = vunpack.c.l.b16 %v1066
  %v1196 = vunpack.c.l.b16 %v1067
  %v1197 = vunpack.c.l.b16 %v1068
  %v1198 = vunpack.c.l.b16 %v1069
  %v1199 = vunpack.c.l.b16 %v1070
  %v1200 = vunpack.c.l.b16 %v1071
  %v1201 = vunpack.c.l.b16 %v1072
  %v1202 = vunpack.c.l.b16 %v1073
  %v1203 = vunpack.c.l.b16 %v1074
  %v1204 = vunpack.c.l.b16 %v1075
  %v1205 = vunpack.c.l.b16 %v1076
  %v1206 = vpack.c.b16 %v1191, %v1190
  %v1207 = vpack.c.b16 %v1193, %v1192
  %v1208 = vpack.c.b16 %v1195, %v1194
  %v1209 = vpack.c.b16 %v1197, %v1196
  %v1210 = vpack.c.b16 %v1199, %v1198
  %v1211 = vpack.c.b16 %v1201, %v1200
  %v1212 = vpack.c.b16 %v1203, %v1202
  %v1213 = vpack.c.b16 %v1205, %v1204
  %1222 = vmatprep.subr.bf16.mxu0 0
  %1223 = vmatpush1.bf16.msra.mxu0 %v1059
  %1224 = vmatprep.subr.bf16.mxu0 0
  %1225 = vmatpush1.bf16.msra.mxu0 %v1058
  %1226 = vmatprep.subr.bf16.mxu0 0
  %1227 = vmatpush1.bf16.msra.mxu0 %v1057
  %1228 = vmatprep.subr.bf16.mxu0 0
  %1229 = vmatpush1.bf16.msra.mxu0 %v1056
  %1230 = vmatprep.subr.bf16.mxu0 0
  %1231 = vmatpush1.bf16.msra.mxu0 %v1055
  %1232 = vmatprep.subr.bf16.mxu0 0
  %1233 = vmatpush1.bf16.msra.mxu0 %v1054
  %1234 = vmatprep.subr.bf16.mxu0 0
  %1235 = vmatpush1.bf16.msra.mxu0 %v1053
  %1236 = vmatprep.subr.bf16.mxu0 0
  %1237 = vmatpush1.bf16.msra.mxu0 %v1052
  %1238 = vmatprep.subr.bf16.mxu0 0
  %1239 = vmatpush2.bf16.msra.mxu0 0
  %1240 = vmatprep.subr.bf16.mxu0 0
  %1241 = vmatpush2.bf16.msra.mxu0 0
  %1242 = vmatprep.subr.bf16.mxu0 0
  %1243 = vmatpush2.bf16.msra.mxu0 0
  %1244 = vmatprep.subr.bf16.mxu0 0
  %1245 = vmatpush2.bf16.msra.mxu0 0
  %1246 = vmatprep.subr.bf16.mxu0 0
  %1247 = vmatpush2.bf16.msra.mxu0 0
  %1248 = vmatprep.subr.bf16.mxu0 0
  %1249 = vmatpush2.bf16.msra.mxu0 0
  %1250 = vmatprep.subr.bf16.mxu0 0
  %1251 = vmatpush2.bf16.msra.mxu0 0
  %1252 = vmatprep.subr.bf16.mxu0 0
  %1253 = vmatpush2.bf16.msra.mxu0 0
  %1254 = vmatprep.mubr.bf16.mxu0 0
  %1255 = vmatmul.mubr.bf16.gmra.mxu0 %v1206
  %v1256 = vpop.f32.mrf.mxu0
  %v1257 = vadd.f32 %v1097, %v1256
  %v1258 = vpop.f32.mrf.mxu0
  %v1259 = vpop.f32.mrf.mxu0
  %v1260 = vadd.f32 %v1102, %v1259
  %v1261 = vpop.f32.mrf.mxu0
  %1262 = vmatprep.mubr.bf16.mxu0 0
  %1263 = vmatmul.mubr.bf16.gmra.mxu0 %v1207
  %v1264 = vpop.f32.mrf.mxu0
  %v1265 = vadd.f32 %v1107, %v1264
  %v1266 = vpop.f32.mrf.mxu0
  %v1267 = vpop.f32.mrf.mxu0
  %v1268 = vadd.f32 %v1112, %v1267
  %v1269 = vpop.f32.mrf.mxu0
  %1270 = vmatprep.mubr.bf16.mxu0 0
  %1271 = vmatmul.mubr.bf16.gmra.mxu0 %v1208
  %v1272 = vpop.f32.mrf.mxu0
  %v1273 = vadd.f32 %v1117, %v1272
  %v1274 = vpop.f32.mrf.mxu0
  %v1275 = vpop.f32.mrf.mxu0
  %v1276 = vadd.f32 %v1122, %v1275
  %v1277 = vpop.f32.mrf.mxu0
  %1278 = vmatprep.mubr.bf16.mxu0 0
  %1279 = vmatmul.mubr.bf16.gmra.mxu0 %v1209
  %v1280 = vpop.f32.mrf.mxu0
  %v1281 = vadd.f32 %v1127, %v1280
  %v1282 = vpop.f32.mrf.mxu0
  %v1283 = vpop.f32.mrf.mxu0
  %v1284 = vadd.f32 %v1132, %v1283
  %v1285 = vpop.f32.mrf.mxu0
  %1286 = vmatprep.mubr.bf16.mxu0 0
  %1287 = vmatmul.mubr.bf16.gmra.mxu0 %v1210
  %v1288 = vpop.f32.mrf.mxu0
  %v1289 = vadd.f32 %v1137, %v1288
  %v1290 = vpop.f32.mrf.mxu0
  %v1291 = vpop.f32.mrf.mxu0
  %v1292 = vadd.f32 %v1142, %v1291
  %v1293 = vpop.f32.mrf.mxu0
  %1294 = vmatprep.mubr.bf16.mxu0 0
  %1295 = vmatmul.mubr.bf16.gmra.mxu0 %v1211
  %v1296 = vpop.f32.mrf.mxu0
  %v1297 = vadd.f32 %v1147, %v1296
  %v1298 = vpop.f32.mrf.mxu0
  %v1299 = vpop.f32.mrf.mxu0
  %v1300 = vadd.f32 %v1152, %v1299
  %v1301 = vpop.f32.mrf.mxu0
  %1302 = vmatprep.mubr.bf16.mxu0 0
  %1303 = vmatmul.mubr.bf16.gmra.mxu0 %v1212
  %v1304 = vpop.f32.mrf.mxu0
  %v1305 = vadd.f32 %v1157, %v1304
  %v1306 = vpop.f32.mrf.mxu0
  %v1307 = vpop.f32.mrf.mxu0
  %v1308 = vadd.f32 %v1162, %v1307
  %v1309 = vpop.f32.mrf.mxu0
  %1310 = vmatprep.mubr.bf16.mxu0 0
  %1311 = vmatmul.mubr.bf16.gmra.mxu0 %v1213
  %v1312 = vpop.f32.mrf.mxu0
  %v1313 = vadd.f32 %v1167, %v1312
  %v1314 = vpop.f32.mrf.mxu0
  %v1315 = vpop.f32.mrf.mxu0
  %v1316 = vadd.f32 %v1172, %v1315
  %v1317 = vpop.f32.mrf.mxu0
  %1318 = vdwg.mxu0
  %v1319 = vmul.f32 %v1257, 0.01
  %v1320 = vmul.f32 %v1260, 0.01
  %v1321 = vmul.f32 %v1265, 0.01
  %v1322 = vmul.f32 %v1268, 0.01
  %v1323 = vmul.f32 %v1273, 0.01
  %v1324 = vmul.f32 %v1276, 0.01
  %v1325 = vmul.f32 %v1281, 0.01
  %v1326 = vmul.f32 %v1284, 0.01
  %v1327 = vmul.f32 %v1289, 0.01
  %v1328 = vmul.f32 %v1292, 0.01
  %v1329 = vmul.f32 %v1297, 0.01
  %v1330 = vmul.f32 %v1300, 0.01
  %v1331 = vmul.f32 %v1305, 0.01
  %v1332 = vmul.f32 %v1308, 0.01
  %v1333 = vmul.f32 %v1313, 0.01
  %v1334 = vmul.f32 %v1316, 0.01
  %v1335 = vmax.f32 %v1257, %v1319
  %v1336 = vmax.f32 %v1260, %v1320
  %v1337 = vmax.f32 %v1265, %v1321
  %v1338 = vmax.f32 %v1268, %v1322
  %v1339 = vmax.f32 %v1273, %v1323
  %v1340 = vmax.f32 %v1276, %v1324
  %v1341 = vmax.f32 %v1281, %v1325
  %v1342 = vmax.f32 %v1284, %v1326
  %v1343 = vmax.f32 %v1289, %v1327
  %v1344 = vmax.f32 %v1292, %v1328
  %v1345 = vmax.f32 %v1297, %v1329
  %v1346 = vmax.f32 %v1300, %v1330
  %v1347 = vmax.f32 %v1305, %v1331
  %v1348 = vmax.f32 %v1308, %v1332
  %v1349 = vmax.f32 %v1313, %v1333
  %v1350 = vmax.f32 %v1316, %v1334
  %v1351 = vpack.c.bf16 %v1336, %v1335
  %v1352 = vpack.c.bf16 %v1338, %v1337
  %v1353 = vpack.c.bf16 %v1340, %v1339
  %v1354 = vpack.c.bf16 %v1342, %v1341
  %v1355 = vpack.c.bf16 %v1344, %v1343
  %v1356 = vpack.c.bf16 %v1346, %v1345
  %v1357 = vpack.c.bf16 %v1348, %v1347
  %v1358 = vpack.c.bf16 %v1350, %v1349
  %v1359 = vld [vmem:[%s5] sm:$0x1]
  %v1360 = vld [vmem:[%s6] sm:$0x3]
  %1362 = vset.pattern.permute.xlu0 0
  %1363 = vperm.xlu0 %1362, %v1360
  %v1364 = vpop.permute.xlu0 %1363
  %1366 = vmatprep.subr.bf16.mxu0 0
  %1367 = vmatpush1.bf16.msra.mxu0 %v1358
  %1368 = vmatprep.subr.bf16.mxu0 0
  %1369 = vmatpush1.bf16.msra.mxu0 %v1357
  %1370 = vmatprep.subr.bf16.mxu0 0
  %1371 = vmatpush1.bf16.msra.mxu0 %v1356
  %1372 = vmatprep.subr.bf16.mxu0 0
  %1373 = vmatpush1.bf16.msra.mxu0 %v1355
  %1374 = vmatprep.subr.bf16.mxu0 0
  %1375 = vmatpush1.bf16.msra.mxu0 %v1354
  %1376 = vmatprep.subr.bf16.mxu0 0
  %1377 = vmatpush1.bf16.msra.mxu0 %v1353
  %1378 = vmatprep.subr.bf16.mxu0 0
  %1379 = vmatpush1.bf16.msra.mxu0 %v1352
  %1380 = vmatprep.subr.bf16.mxu0 0
  %1381 = vmatpush1.bf16.msra.mxu0 %v1351
  %1382 = vmatprep.subr.bf16.mxu0 0
  %1383 = vmatpush2.bf16.msra.mxu0 0
  %1384 = vmatprep.subr.bf16.mxu0 0
  %1385 = vmatpush2.bf16.msra.mxu0 0
  %1386 = vmatprep.subr.bf16.mxu0 0
  %1387 = vmatpush2.bf16.msra.mxu0 0
  %1388 = vmatprep.subr.bf16.mxu0 0
  %1389 = vmatpush2.bf16.msra.mxu0 0
  %1390 = vmatprep.subr.bf16.mxu0 0
  %1391 = vmatpush2.bf16.msra.mxu0 0
  %1392 = vmatprep.subr.bf16.mxu0 0
  %1393 = vmatpush2.bf16.msra.mxu0 0
  %1394 = vmatprep.subr.bf16.mxu0 0
  %1395 = vmatpush2.bf16.msra.mxu0 0
  %1396 = vmatprep.subr.bf16.mxu0 0
  %1397 = vmatpush2.bf16.msra.mxu0 0
  %1398 = vmatprep.mubr.bf16.mxu0 0
  %1399 = vmatmul.mubr.bf16.gmra.mxu0 %v1359
  %v1400 = vpop.f32.mrf.mxu0
  %v1401 = vadd.f32 %v1364, %v1400
  %v1402 = vpop.f32.mrf.mxu0
  %v1403 = vpop.f32.mrf.mxu0
  %v1404 = vpop.f32.mrf.mxu0
  %1405 = vdwg.mxu0
  %v1406 = vsub.f32 %v1401, %v27
  %vm1407 = vcmask 123904
  %1408 = vst.msk [vmem:[%s7] sm:$0x3] %vm1407, %v1406
  // Predicated region
  $region30: #{mlp_denoiser.1} parent=0 // pred_check
    _
  $region31: #{mlp_denoiser.1} parent=0 // pred_check_branch
    %1410 = sbr.rel (0) target = $region33
  $region32: #{mlp_denoiser.1} parent=0 // pred_region
    _
  $region33: #{mlp_denoiser.1} parent=0 // pred_fallthru
    _
  // Predicated region
  $region34: #{mlp_denoiser.1} parent=0 // pred_check
    _
  $region35: #{mlp_denoiser.1} parent=0 // pred_check_branch
    %1412 = sbr.rel (0) target = $region37
  $region36: #{mlp_denoiser.1} parent=0 // pred_region
    _
  $region37: #{mlp_denoiser.1} parent=0 // pred_fallthru
    _

</llo_original>
